<compile_context>
chip_gen: v5e
topology: v5e:2x2
jax: 0.10.0
libtpu: 0.0.40
codegen_flags: <defaults>
</compile_context>

<pallas_src>
import functools
import math

import jax
import jax.numpy as jnp
from jax import lax
from jax.experimental import pallas as pl
from jax.experimental.pallas import tpu as pltpu


def _round_up(n, m):
    return -(-n // m) * m


def _add_pe_slab(x_ref, o_ref, pe, *, batch, d_model, lane_aligned):
    """o = x + pe, where pe is a batch-free (tile_s, d_model) slab in o_ref.dtype."""
    if batch == 1:
        o_ref[...] = x_ref[...] + pe
    elif lane_aligned:
        # d_model % 128 == 0: lane-aligned static slices, one add per batch
        # element.  Avoids materializing a replicated (tile_s, batch*d_model)
        # temp (which would be an extra full store+load pass through VMEM).
        for b in range(batch):
            sl = slice(b * d_model, (b + 1) * d_model)
            o_ref[:, sl] = x_ref[:, sl] + pe
    else:
        # Fallback for d_model not a multiple of 128 (tiny test shapes): the
        # slab is already in the (possibly narrower) output dtype, so the
        # replicated temp is as small as it can be.
        o_ref[...] = x_ref[...] + jnp.concatenate([pe] * batch, axis=-1)


def _pe_table_kernel(x_ref, pe_ref, o_ref, *, batch, d_model, lane_aligned):
    """Streams a precomputed (tile_s, d_model) PE slice and adds it per batch."""
    pe = pe_ref[...]  # already o_ref.dtype
    _add_pe_slab(x_ref, o_ref, pe,
                 batch=batch, d_model=d_model, lane_aligned=lane_aligned)


def _pe_generate_kernel(x_ref, o_ref, *, tile_s, batch, d_model, lane_aligned):
    """Generates the batch-free PE slab on the fly (exact sin/cos) and adds it."""
    i = pl.program_id(0)  # block index along the sequence axis

    # Absolute sequence position of every row of this block: (tile_s, 1).
    row = lax.broadcasted_iota(jnp.int32, (tile_s, 1), 0)
    pos = (row + i * tile_s).astype(jnp.float32)

    # Batch-free, position-free column terms, shape (1, d_model).
    col = lax.broadcasted_iota(jnp.int32, (1, d_model), 1)
    half = col % 2                                   # 0 -> sin column, 1 -> cos column
    even_col = (col - half).astype(jnp.float32)      # 2k for both columns 2k and 2k+1
    div_term = jnp.exp(even_col * jnp.float32(-math.log(10000.0) / d_model))

    arg = pos * div_term                             # (tile_s, d_model)
    # Exact sin for even columns, exact cos for odd columns (no phase-add
    # folding, so large positions stay bit-close to the PyTorch buffer).
    pe = jnp.where(half == 0, jnp.sin(arg), jnp.cos(arg)).astype(o_ref.dtype)

    _add_pe_slab(x_ref, o_ref, pe,
                 batch=batch, d_model=d_model, lane_aligned=lane_aligned)


def _pe_table(seq_len, d_model, dtype):
    """(seq_len, d_model) sinusoidal table, identical to the PyTorch buffer."""
    position = jnp.arange(seq_len, dtype=jnp.float32)[:, None]           # (S, 1)
    div_term = jnp.exp(jnp.arange(0, d_model, 2, dtype=jnp.float32)
                       * (-math.log(10000.0) / d_model))                 # (D/2,)
    ang = position * div_term                                            # (S, D/2)
    pe = jnp.stack([jnp.sin(ang), jnp.cos(ang)], axis=-1).reshape(seq_len, d_model)
    return pe.astype(dtype)


def positional_encoding(x, *, max_len=5000, target_block_bytes=4 << 20,
                        pe_table_max_batch=4):
    """x: (seq_len, batch, d_model). Returns x + pe[:seq_len] (PyTorch semantics)."""
    S, B, D = x.shape
    assert S <= max_len, "sequence length exceeds max_len"
    assert D % 2 == 0, "d_model must be even (matches the PyTorch module)"

    # Lane-dense 2D view: batch folded into the lane axis (free metadata op).
    x2 = x.reshape(S, B * D)
    lane_aligned = (D % 128 == 0)
    # TODO(synk): when B*D is not a multiple of 128 (only tiny test shapes),
    # stores are masked vst.msk; a padded-lane path is not worth the complexity.

    # For small batch, stream a precomputed PE slice (kernel stays HBM-bound);
    # for larger batch, generate pe in-kernel (transcendental cost amortized 1/B,
    # no extra HBM read traffic).
    use_pe_table = B <= pe_table_max_batch

    # Tile the sequence axis: ~target_block_bytes per step, rows a multiple of 8,
    # and at least 2 grid steps for S >= 16 (v7x has 2 TensorCores per chip).
    row_bytes = B * D * x.dtype.itemsize
    if use_pe_table:
        row_bytes += D * x.dtype.itemsize
    if S <= 8:
        tile_s = S
    else:
        tile_s = max(8, (target_block_bytes // row_bytes) // 8 * 8)
        if S >= 16:
            tile_s = min(tile_s, _round_up(pl.cdiv(S, 2), 8))
        tile_s = min(tile_s, S)
    grid = (pl.cdiv(S, tile_s),)

    compiler_params = pltpu.CompilerParams(
        dimension_semantics=("parallel",),
        # ~2x(in)+2x(out)+2x(pe) double-buffered at 4 MiB blocks stays well under
        # this on every generation (v7x physical VMEM is 64 MiB).
        vmem_limit_bytes=32 * 1024 * 1024,
    )
    out_shape = jax.ShapeDtypeStruct((S, B * D), x.dtype)
    x_spec = pl.BlockSpec((tile_s, B * D), lambda i: (i, 0))
    o_spec = pl.BlockSpec((tile_s, B * D), lambda i: (i, 0))

    if use_pe_table:
        pe = _pe_table(S, D, x.dtype)
        kernel = functools.partial(_pe_table_kernel, batch=B, d_model=D,
                                   lane_aligned=lane_aligned)
        out2 = pl.pallas_call(
            kernel,
            out_shape=out_shape,
            grid=grid,
            in_specs=[x_spec, pl.BlockSpec((tile_s, D), lambda i: (i, 0))],
            out_specs=o_spec,
            input_output_aliases={0: 0},
            compiler_params=compiler_params,
        )(x2, pe)
    else:
        kernel = functools.partial(_pe_generate_kernel, tile_s=tile_s, batch=B,
                                   d_model=D, lane_aligned=lane_aligned)
        out2 = pl.pallas_call(
            kernel,
            out_shape=out_shape,
            grid=grid,
            in_specs=[x_spec],
            out_specs=o_spec,
            input_output_aliases={0: 0},
            compiler_params=compiler_params,
        )(x2)

    return out2.reshape(S, B, D)


def positional_encoding_ref(x, max_len=5000):
    """Pure-JAX reference mirroring the PyTorch buffer construction."""
    S, B, D = x.shape
    position = jnp.arange(max_len, dtype=jnp.float32)[:, None]            # (max_len, 1)
    div_term = jnp.exp(jnp.arange(0, D, 2, dtype=jnp.float32)
                       * (-math.log(10000.0) / D))                        # (D/2,)
    pe = jnp.zeros((max_len, D), dtype=jnp.float32)
    pe = pe.at[:, 0::2].set(jnp.sin(position * div_term))
    pe = pe.at[:, 1::2].set(jnp.cos(position * div_term))
    pe = pe[:, None, :]                                                   # (max_len, 1, D)
    return x + pe[:S, :]


if __name__ == "__main__":
    key = jax.random.PRNGKey(0)

    # Small shape implied by the transformer module: (seq_len, batch, d_model).
    seq_len, batch, d_model = 8, 2, 32
    x = jax.random.normal(key, (seq_len, batch, d_model), dtype=jnp.float32)

    out = jax.block_until_ready(positional_encoding(x))
    ref = positional_encoding_ref(x)
    assert out.shape == x.shape and out.dtype == x.dtype
    assert jnp.allclose(out, ref, atol=1e-5, rtol=1e-5), "mismatch vs reference"

    # Multi-block + ragged-last-block + PE-table path (non-128 lane fallback).
    x2 = jax.random.normal(jax.random.PRNGKey(1), (37, 3, 64), dtype=jnp.float32)
    out2 = jax.block_until_ready(positional_encoding(x2, target_block_bytes=4096))
    ref2 = positional_encoding_ref(x2)
    assert jnp.allclose(out2, ref2, atol=1e-5, rtol=1e-5), "mismatch (ragged, table)"

    # PE-table path with lane-aligned per-batch sliced adds (D % 128 == 0).
    x3 = jax.random.normal(jax.random.PRNGKey(2), (32, 2, 128), dtype=jnp.float32)
    out3 = jax.block_until_ready(positional_encoding(x3))
    ref3 = positional_encoding_ref(x3)
    assert jnp.allclose(out3, ref3, atol=1e-5, rtol=1e-5), "mismatch (table, aligned)"

    # In-kernel generation path (batch above the PE-table threshold), 2-step grid.
    x4 = jax.random.normal(jax.random.PRNGKey(3), (64, 8, 128), dtype=jnp.float32)
    out4 = jax.block_until_ready(positional_encoding(x4))
    ref4 = positional_encoding_ref(x4)
    assert jnp.allclose(out4, ref4, atol=1e-5, rtol=1e-5), "mismatch (generated)"

    print("KERNEL_OK")
</pallas_src>

<mosaic_0001>
module attributes {stable_mosaic.version = 11 : i64} {
  func.func @_pe_table_kernel(%arg0: i32, %arg1: memref<8x64xf32, #tpu.memory_space<vmem>>, %arg2: memref<8x32xf32, #tpu.memory_space<vmem>>, %arg3: memref<8x64xf32, #tpu.memory_space<vmem>>) attributes {dimension_semantics = [#tpu.dimension_semantics<parallel>], iteration_bounds = array<i64: 1>, scalar_prefetch = 0 : i64, scratch_operands = 0 : i64, tpu.core_type = #tpu.core_type<tc>, window_params = [{transform_indices = @transform_0, window_bounds = array<i64: 8, 64>}, {transform_indices = @transform_1, window_bounds = array<i64: 8, 32>}, {transform_indices = @transform_2, window_bounds = array<i64: 8, 64>}]} {
    %c0 = arith.constant 0 : index
    %c0_0 = arith.constant 0 : index
    %0 = vector.load %arg2[%c0, %c0_0] : memref<8x32xf32, #tpu.memory_space<vmem>>, vector<8x32xf32>
    %c0_1 = arith.constant 0 : index
    %c0_2 = arith.constant 0 : index
    %1 = vector.load %arg1[%c0_1, %c0_2] : memref<8x64xf32, #tpu.memory_space<vmem>>, vector<8x64xf32>
    %2 = tpu.concatenate %0, %0 in 1 : vector<8x32xf32>, vector<8x32xf32> -> vector<8x64xf32>
    %3 = arith.addf %1, %2 : vector<8x64xf32>
    %c0_3 = arith.constant 0 : index
    %c0_4 = arith.constant 0 : index
    %4 = vector.load %arg3[%c0_3, %c0_4] : memref<8x64xf32, #tpu.memory_space<vmem>>, vector<8x64xf32>
    tpu.vector_store %arg3[%c0_3, %c0_4], %3 {strides = array<i32>} : memref<8x64xf32, #tpu.memory_space<vmem>>, vector<8x64xf32>,
    return
  }
  func.func @transform_0(%arg0: i32) -> (i32, i32) {
    %c0_i32 = arith.constant 0 : i32
    %c0_i32_0 = arith.constant 0 : i32
    return %arg0, %c0_i32 : i32, i32
  }
  func.func @transform_1(%arg0: i32) -> (i32, i32) {
    %c0_i32 = arith.constant 0 : i32
    %c0_i32_0 = arith.constant 0 : i32
    return %arg0, %c0_i32 : i32, i32
  }
  func.func @transform_2(%arg0: i32) -> (i32, i32) {
    %c0_i32 = arith.constant 0 : i32
    %c0_i32_0 = arith.constant 0 : i32
    return %arg0, %c0_i32 : i32, i32
  }
}

</mosaic_0001>

<llo_original>
// kernel: tpu_custom_call.1
$region0: #{tpu_custom_call.1}
  #allocation0 [shape = 'u32[]', space=smem, size = 0x4, offset = 0x4, fixed_abs, tag = 'smem constant byte address 0x4 - core index']
  #allocation1 [shape = 'u32[72,128]{1,0:T(1,128)}', space=vmem, size = 0x9000, scoped, tag = 'internal scratch']
  %s0 = inlined_call_operand.hbm [shape: f32[8,64], index: 0, kind: input, shape index: {}, may-alias: {0,2}]
  %s1 = inlined_call_operand.vmem [shape: f32[8,32], index: 1, kind: input, shape index: {}]
  %s2 = inlined_call_operand.hbm [shape: f32[8,64], index: 2, kind: output, shape index: {}, may-alias: {0,2}]
  %s3 = sld [smem:[#allocation0]]
  $region22: #{tpu_custom_call.1} parent=0
    _
  %s5 = ssub.s32 1, %s3
  %s6 = scalar_select 0, %s5, %s3
  $region1: #{tpu_custom_call.1} parent=0
    #allocation2 [shape = 'u8[4096]{0}', space=vmem, size = 0x1000, scoped, tag = 'input window, operand 0, single buffered']
    #allocation3 [shape = 's32[1]{0}', space=sflag, size = 0x4, scoped, tag = 'scoped memory for tpu_custom_call.1']
    #allocation4 [shape = 's32[1]{0}', space=sflag, size = 0x4, scoped, tag = 'scoped memory for tpu_custom_call.1']
    #allocation5 [shape = 'u8[4096]{0}', space=vmem, size = 0x1000, scoped, tag = 'output window, operand 0, single buffered']
    %7 = vsyncpa [#allocation3], 0
    %8 = vsyncpa [#allocation4], 0
    // Predicated region
    $region2: #{tpu_custom_call.1} parent=1 // pred_check
      _
    $region3: #{tpu_custom_call.1} parent=1 // pred_check_branch
      %10 = sbr.rel (0) target = $region5
    $region4: #{tpu_custom_call.1} parent=1 // pred_region
      %12 = vsyncadd [#allocation3], 0
      %s14 = sshll.u32 %s0, 4
      %s15 = int_to_ptr.hbm [resolvable:$true] %s14
      %s16 = sshll.u32 [#allocation2], 4
      %s17 = int_to_ptr.vmem [resolvable:$true] %s16
      %19 = dma.hbm_to_vmem [thread:$0]  %s15, 128, %s17, [#allocation3]
    $region5: #{tpu_custom_call.1} parent=1 // pred_fallthru
      _
    // Predicated region
    $region6: #{tpu_custom_call.1} parent=1 // pred_check
      _
    $region7: #{tpu_custom_call.1} parent=1 // pred_check_branch
      %21 = sbr.rel (0) target = $region9
    $region8: #{tpu_custom_call.1} parent=1 // pred_region
      _
    $region9: #{tpu_custom_call.1} parent=1 // pred_fallthru
      _
    // Predicated region
    $region10: #{tpu_custom_call.1} parent=1 // pred_check
      _
    $region11: #{tpu_custom_call.1} parent=1 // pred_check_branch
      %23 = sbr.rel (0) target = $region13
    $region12: #{tpu_custom_call.1} parent=1 // pred_region
      %25 = dma.done [#allocation3], 128
    $region13: #{tpu_custom_call.1} parent=1 // pred_fallthru
      _
    %v26 = vld [vmem:[%s1] sm:$0xff]
    %v27 = vld [vmem:[#allocation2] sm:$0xff]
    %29 = vrot.lane.b32.xlu0 %v26, 32
    %v30 = vpop.permute.xlu0 %29
    %vm32 = vcmask 261120
    %v33 = vsel %vm32, %v26, %v30
    %v34 = vadd.f32 %v27, %v33
    %vm35 = vcmask 523264
    %36 = vst.msk [vmem:[#allocation5] sm:$0xff] %vm35, %v34
    // Predicated region
    $region14: #{tpu_custom_call.1} parent=1 // pred_check
      _
    $region15: #{tpu_custom_call.1} parent=1 // pred_check_branch
      %38 = sbr.rel (0) target = $region17
    $region16: #{tpu_custom_call.1} parent=1 // pred_region
      %40 = vsyncadd [#allocation4], 0
      %s42 = sshll.u32 [#allocation5], 4
      %s43 = int_to_ptr.vmem [resolvable:$true] %s42
      %s44 = sshll.u32 %s2, 4
      %s45 = int_to_ptr.hbm [resolvable:$true] %s44
      %47 = dma.vmem_to_hbm [thread:$0]  %s43, 128, %s45, [#allocation4]
    $region17: #{tpu_custom_call.1} parent=1 // pred_fallthru
      _
    // Predicated region
    $region18: #{tpu_custom_call.1} parent=1 // pred_check
      _
    $region19: #{tpu_custom_call.1} parent=1 // pred_check_branch
      %49 = sbr.rel (0) target = $region21
    $region20: #{tpu_custom_call.1} parent=1 // pred_region
      %51 = dma.done [#allocation4], 128
    $region21: #{tpu_custom_call.1} parent=1 // pred_fallthru
      _
    %52 = vsyncpa [#allocation3], 1
    %53 = vsyncpa [#allocation4], 1

</llo_original>
